<compile_context>
chip_gen: v6e
topology: v6e:2x2x1
jax: 0.10.0
libtpu: 0.0.40
codegen_flags: <defaults>
</compile_context>

<pallas_src>
import functools

import jax
import jax.numpy as jnp
from jax.experimental import pallas as pl
from jax.experimental.pallas import tpu as pltpu


def _round_up(x: int, m: int) -> int:
    return ((x + m - 1) // m) * m


def _bn_stats_kernel(x_ref, mean_ref, invstd_ref, *, n_rows: int, eps: float):
    """Accumulate per-feature sum / sum-of-squares across batch tiles, then
    finalize to (mean, 1/sqrt(var + eps)) at the last grid step."""
    i = pl.program_id(0)

    @pl.when(i == 0)
    def _():
        mean_ref[...] = jnp.zeros_like(mean_ref)
        invstd_ref[...] = jnp.zeros_like(invstd_ref)

    x = x_ref[...].astype(jnp.float32)                         # (TM, D)
    mean_ref[...] += jnp.sum(x, axis=0, keepdims=True)         # running sum(x)
    invstd_ref[...] += jnp.sum(x * x, axis=0, keepdims=True)   # running sum(x^2)

    @pl.when(i == pl.num_programs(0) - 1)
    def _():
        inv_n = jnp.float32(1.0 / n_rows)
        mean = mean_ref[...] * inv_n
        var = invstd_ref[...] * inv_n - mean * mean            # biased var
        mean_ref[...] = mean
        invstd_ref[...] = jax.lax.rsqrt(var + jnp.float32(eps))


def _bn_apply_kernel(x_ref, mean_ref, invstd_ref, gamma_ref, beta_ref, o_ref):
    """y = (x - mean) * invstd * gamma + beta, fused as one scale + shift."""
    x = x_ref[...].astype(jnp.float32)                         # (TM, D)
    scale = gamma_ref[...] * invstd_ref[...]                   # (1, D)
    shift = beta_ref[...] - mean_ref[...] * scale              # (1, D)
    o_ref[...] = (x * scale + shift).astype(o_ref.dtype)


def cont_embedder_forward(cont, *, gamma=None, beta=None, input_bn: bool = True,
                          eps: float = 1e-5, tile_rows: int | None = None):
    """JAX/Pallas equivalent of ContEmbedder(num_dims, input_bn).forward({'cont': cont})."""
    cont = jnp.asarray(cont)
    if not input_bn:           # self.bn is None -> identity passthrough
        return cont

    n, d = cont.shape
    f32 = jnp.float32
    gamma = (jnp.ones((1, d), f32) if gamma is None
             else jnp.asarray(gamma, f32).reshape(1, d))
    beta = (jnp.zeros((1, d), f32) if beta is None
            else jnp.asarray(beta, f32).reshape(1, d))

    # Batch-tile sizing: ~4 MiB per x tile (pipeline double-buffers it).
    if tile_rows is None:
        budget_rows = max(8, (4 * 1024 * 1024) // (d * cont.dtype.itemsize))
        tile_rows = min(512, budget_rows, _round_up(n, 8))
    tile_rows = max(8, (tile_rows // 8) * 8)

    n_pad = _round_up(n, tile_rows)
    if n_pad != n:
        cont_p = jnp.zeros((n_pad, d), cont.dtype).at[:n].set(cont)
    else:
        cont_p = cont
    grid = (n_pad // tile_rows,)
    vmem_limit = 32 * 1024 * 1024

    # ---- Pass 1: batch statistics (reduction over the grid axis) ----------
    mean, invstd = pl.pallas_call(
        functools.partial(_bn_stats_kernel, n_rows=n, eps=eps),
        out_shape=(jax.ShapeDtypeStruct((1, d), f32),
                   jax.ShapeDtypeStruct((1, d), f32)),
        grid=grid,
        in_specs=[pl.BlockSpec((tile_rows, d), lambda i: (i, 0))],
        out_specs=(pl.BlockSpec((1, d), lambda i: (0, 0)),
                   pl.BlockSpec((1, d), lambda i: (0, 0))),
        compiler_params=pltpu.CompilerParams(
            dimension_semantics=("arbitrary",),
            vmem_limit_bytes=vmem_limit),
    )(cont_p)
    # TODO(synk): on v7x the stats reduction could be split across both
    # TensorCores with per-core partial sums; left serial here.

    # ---- Pass 2: normalize + affine (independent tiles -> parallel) -------
    y = pl.pallas_call(
        _bn_apply_kernel,
        out_shape=jax.ShapeDtypeStruct((n_pad, d), cont.dtype),
        grid=grid,
        in_specs=[pl.BlockSpec((tile_rows, d), lambda i: (i, 0)),
                  pl.BlockSpec((1, d), lambda i: (0, 0)),
                  pl.BlockSpec((1, d), lambda i: (0, 0)),
                  pl.BlockSpec((1, d), lambda i: (0, 0)),
                  pl.BlockSpec((1, d), lambda i: (0, 0))],
        out_specs=pl.BlockSpec((tile_rows, d), lambda i: (i, 0)),
        compiler_params=pltpu.CompilerParams(
            dimension_semantics=("parallel",),
            vmem_limit_bytes=vmem_limit),
    )(cont_p, mean, invstd, gamma, beta)

    return y[:n] if n_pad != n else y


def _reference_bn(x, gamma, beta, eps=1e-5):
    x = jnp.asarray(x, jnp.float32)
    mean = x.mean(axis=0)
    var = x.var(axis=0)  # biased, as torch BatchNorm1d uses for normalization
    return (x - mean) / jnp.sqrt(var + eps) * gamma + beta


if __name__ == "__main__":
    key = jax.random.PRNGKey(0)
    k1, k2, k3 = jax.random.split(key, 3)

    batch, num_dims = 200, 32
    cont = jax.random.normal(k1, (batch, num_dims), jnp.float32) * 2.0 + 0.5
    gamma = jax.random.uniform(k2, (num_dims,), jnp.float32, 0.5, 1.5)
    beta = jax.random.normal(k3, (num_dims,), jnp.float32) * 0.1

    # input_bn=True, custom affine params; small tile forces a multi-step grid
    # with a padded final tile (exercises the accumulator + padding path).
    out = cont_embedder_forward(cont, gamma=gamma, beta=beta,
                                input_bn=True, tile_rows=64)
    jax.block_until_ready(out)
    ref = _reference_bn(cont, gamma, beta)
    assert out.shape == ref.shape
    assert jnp.allclose(out, ref, rtol=1e-4, atol=1e-4), \
        float(jnp.max(jnp.abs(out - ref)))

    # Default affine params (gamma=1, beta=0), auto tile sizing.
    out2 = cont_embedder_forward(cont)
    jax.block_until_ready(out2)
    ref2 = _reference_bn(cont, jnp.ones((num_dims,), jnp.float32),
                         jnp.zeros((num_dims,), jnp.float32))
    assert jnp.allclose(out2, ref2, rtol=1e-4, atol=1e-4)

    # input_bn=False -> identity passthrough (bn is None in the module).
    out3 = cont_embedder_forward(cont, input_bn=False)
    jax.block_until_ready(out3)
    assert jnp.array_equal(out3, cont)

    print("KERNEL_OK")
</pallas_src>

<mosaic_0001>
module attributes {stable_mosaic.version = 11 : i64} {
  func.func @_bn_stats_kernel(%arg0: i32, %arg1: memref<64x32xf32, #tpu.memory_space<vmem>>, %arg2: memref<1x32xf32, #tpu.memory_space<vmem>>, %arg3: memref<1x32xf32, #tpu.memory_space<vmem>>) attributes {dimension_semantics = [#tpu.dimension_semantics<arbitrary>], iteration_bounds = array<i64: 4>, scalar_prefetch = 0 : i64, scratch_operands = 0 : i64, tpu.core_type = #tpu.core_type<tc>, window_params = [{transform_indices = @transform_0, window_bounds = array<i64: 64, 32>}, {pipeline_mode = #tpu.pipeline_mode<synchronous>, transform_indices = @transform_1, window_bounds = array<i64: 1, 32>}, {pipeline_mode = #tpu.pipeline_mode<synchronous>, transform_indices = @transform_2, window_bounds = array<i64: 1, 32>}]} {
    %c0_i32 = arith.constant 0 : i32
    %0 = arith.cmpi eq, %arg0, %c0_i32 : i32
    %1 = arith.extui %0 : i1 to i32
    %c0_i32_0 = arith.constant 0 : i32
    %2 = arith.cmpi ne, %1, %c0_i32_0 : i32
    scf.if %2 {
      %cst_12 = arith.constant 0.000000e+00 : f32
      %18 = vector.broadcast %cst_12 : f32 to vector<1x32xf32>
      %c0_13 = arith.constant 0 : index
      %c0_14 = arith.constant 0 : index
      %19 = vector.load %arg2[%c0_13, %c0_14] : memref<1x32xf32, #tpu.memory_space<vmem>>, vector<1x32xf32>
      tpu.vector_store %arg2[%c0_13, %c0_14], %18 {strides = array<i32>} : memref<1x32xf32, #tpu.memory_space<vmem>>, vector<1x32xf32>,
      %cst_15 = arith.constant 0.000000e+00 : f32
      %20 = vector.broadcast %cst_15 : f32 to vector<1x32xf32>
      %c0_16 = arith.constant 0 : index
      %c0_17 = arith.constant 0 : index
      %21 = vector.load %arg3[%c0_16, %c0_17] : memref<1x32xf32, #tpu.memory_space<vmem>>, vector<1x32xf32>
      tpu.vector_store %arg3[%c0_16, %c0_17], %20 {strides = array<i32>} : memref<1x32xf32, #tpu.memory_space<vmem>>, vector<1x32xf32>,
    } else {
    }
    %c0 = arith.constant 0 : index
    %c0_1 = arith.constant 0 : index
    %3 = vector.load %arg1[%c0, %c0_1] : memref<64x32xf32, #tpu.memory_space<vmem>>, vector<64x32xf32>
    %c0_2 = arith.constant 0 : index
    %c0_3 = arith.constant 0 : index
    %4 = vector.load %arg2[%c0_2, %c0_3] : memref<1x32xf32, #tpu.memory_space<vmem>>, vector<1x32xf32>
    %cst = arith.constant dense<0.000000e+00> : vector<32xf32>
    %5 = vector.multi_reduction <add>, %3, %cst [0] : vector<64x32xf32> to vector<32xf32>
    %6 = vector.shape_cast %5 : vector<32xf32> to vector<1x32xf32>
    %7 = arith.addf %4, %6 : vector<1x32xf32>
    %c0_4 = arith.constant 0 : index
    %c0_5 = arith.constant 0 : index
    %8 = vector.load %arg2[%c0_4, %c0_5] : memref<1x32xf32, #tpu.memory_space<vmem>>, vector<1x32xf32>
    tpu.vector_store %arg2[%c0_4, %c0_5], %7 {strides = array<i32>} : memref<1x32xf32, #tpu.memory_space<vmem>>, vector<1x32xf32>,
    %c0_6 = arith.constant 0 : index
    %c0_7 = arith.constant 0 : index
    %9 = vector.load %arg3[%c0_6, %c0_7] : memref<1x32xf32, #tpu.memory_space<vmem>>, vector<1x32xf32>
    %10 = arith.mulf %3, %3 : vector<64x32xf32>
    %cst_8 = arith.constant dense<0.000000e+00> : vector<32xf32>
    %11 = vector.multi_reduction <add>, %10, %cst_8 [0] : vector<64x32xf32> to vector<32xf32>
    %12 = vector.shape_cast %11 : vector<32xf32> to vector<1x32xf32>
    %13 = arith.addf %9, %12 : vector<1x32xf32>
    %c0_9 = arith.constant 0 : index
    %c0_10 = arith.constant 0 : index
    %14 = vector.load %arg3[%c0_9, %c0_10] : memref<1x32xf32, #tpu.memory_space<vmem>>, vector<1x32xf32>
    tpu.vector_store %arg3[%c0_9, %c0_10], %13 {strides = array<i32>} : memref<1x32xf32, #tpu.memory_space<vmem>>, vector<1x32xf32>,
    %c3_i32 = arith.constant 3 : i32
    %15 = arith.cmpi eq, %arg0, %c3_i32 : i32
    %16 = arith.extui %15 : i1 to i32
    %c0_i32_11 = arith.constant 0 : i32
    %17 = arith.cmpi ne, %16, %c0_i32_11 : i32
    scf.if %17 {
      %c0_12 = arith.constant 0 : index
      %c0_13 = arith.constant 0 : index
      %18 = vector.load %arg2[%c0_12, %c0_13] : memref<1x32xf32, #tpu.memory_space<vmem>>, vector<1x32xf32>
      %cst_14 = arith.constant 5.000000e-03 : f32
      %19 = vector.broadcast %cst_14 : f32 to vector<1x32xf32>
      %20 = arith.mulf %18, %19 : vector<1x32xf32>
      %c0_15 = arith.constant 0 : index
      %c0_16 = arith.constant 0 : index
      %21 = vector.load %arg3[%c0_15, %c0_16] : memref<1x32xf32, #tpu.memory_space<vmem>>, vector<1x32xf32>
      %cst_17 = arith.constant 5.000000e-03 : f32
      %22 = vector.broadcast %cst_17 : f32 to vector<1x32xf32>
      %23 = arith.mulf %21, %22 : vector<1x32xf32>
      %24 = arith.mulf %20, %20 : vector<1x32xf32>
      %25 = arith.subf %23, %24 : vector<1x32xf32>
      %c0_18 = arith.constant 0 : index
      %c0_19 = arith.constant 0 : index
      %26 = vector.load %arg2[%c0_18, %c0_19] : memref<1x32xf32, #tpu.memory_space<vmem>>, vector<1x32xf32>
      tpu.vector_store %arg2[%c0_18, %c0_19], %20 {strides = array<i32>} : memref<1x32xf32, #tpu.memory_space<vmem>>, vector<1x32xf32>,
      %cst_20 = arith.constant 9.99999974E-6 : f32
      %27 = vector.broadcast %cst_20 : f32 to vector<1x32xf32>
      %28 = arith.addf %25, %27 : vector<1x32xf32>
      %29 = math.rsqrt %28 : vector<1x32xf32>
      %c0_21 = arith.constant 0 : index
      %c0_22 = arith.constant 0 : index
      %30 = vector.load %arg3[%c0_21, %c0_22] : memref<1x32xf32, #tpu.memory_space<vmem>>, vector<1x32xf32>
      tpu.vector_store %arg3[%c0_21, %c0_22], %29 {strides = array<i32>} : memref<1x32xf32, #tpu.memory_space<vmem>>, vector<1x32xf32>,
    } else {
    }
    return
  }
  func.func @transform_0(%arg0: i32) -> (i32, i32) {
    %c0_i32 = arith.constant 0 : i32
    %c0_i32_0 = arith.constant 0 : i32
    return %arg0, %c0_i32 : i32, i32
  }
  func.func @transform_1(%arg0: i32) -> (i32, i32) {
    %c0_i32 = arith.constant 0 : i32
    %c0_i32_0 = arith.constant 0 : i32
    %c0_i32_1 = arith.constant 0 : i32
    return %c0_i32, %c0_i32_0 : i32, i32
  }
  func.func @transform_2(%arg0: i32) -> (i32, i32) {
    %c0_i32 = arith.constant 0 : i32
    %c0_i32_0 = arith.constant 0 : i32
    %c0_i32_1 = arith.constant 0 : i32
    return %c0_i32, %c0_i32_0 : i32, i32
  }
}

</mosaic_0001>

<llo_original>
// kernel: tpu_custom_call.1
$region0: #{tpu_custom_call.1}
  #allocation0 [shape = 'u32[]', space=smem, size = 0x4, offset = 0x4, fixed_abs, tag = 'smem constant byte address 0x4 - core index']
  #allocation1 [shape = 'u32[144,128]{1,0:T(1,128)}', space=vmem, size = 0x12000, scoped, tag = 'internal scratch']
  %s0 = inlined_call_operand.vmem [shape: f32[256,32], index: 0, kind: input, shape index: {}]
  %s1 = inlined_call_operand.hbm [shape: f32[1,32], index: 1, kind: output, shape index: {0}]
  %s2 = inlined_call_operand.hbm [shape: f32[1,32], index: 2, kind: output, shape index: {1}]
  %3 = xla_tuple %s1, %s2
  %s4 = sld [smem:[#allocation0]]
  $region53: #{tpu_custom_call.1} parent=0
    _
  %s6 = ssub.s32 1, %s4
  %s7 = scalar_select 0, %s6, %s4
  $region1: #{tpu_custom_call.1} parent=0
    #allocation2 [shape = 'u8[512]{0}', space=vmem, size = 0x400, scoped, tag = 'output window, operand 0, single buffered']
    #allocation3 [shape = 's32[2]{0}', space=sflag, size = 0x8, scoped, tag = 'scoped memory for tpu_custom_call.1']
    #allocation4 [shape = 'u8[512]{0}', space=vmem, size = 0x400, scoped, tag = 'output window, operand 1, single buffered']
    #allocation5 [shape = 's32[1]{0}', space=sflag, size = 0x4, scoped, tag = 'scoped memory for tpu_custom_call.1']
    %8 = vsyncpa [#allocation3], 0
    %9 = vsyncpa [#allocation5], 0
    loop: start=0, step=1, limit=6
    $region2: #{tpu_custom_call.1} parent=1 // loop_pre_header
      _
    $region3: #{tpu_custom_call.1} parent=1 // loop_header
      %s11 = sphi 0, %s15
      %p12 = scmp.ge.s32.totalorder %s11, 6
      %s21 = sphi 0, %s23
      %s24 = sphi 0, %s21
      %s25 = sphi 0, %s24
      %s41 = sphi 0, %s25
      %s45 = sphi 0, %s45
      %s47 = sphi 0, %s45
      %s48 = sphi 0, %s47
      %s62 = sphi 0, %s48
      %s66 = sphi 0, %s66
      %s68 = sphi 0, %s66
      %s69 = sphi 0, %s68
      %s83 = sphi 0, %s69
    $region4: #{tpu_custom_call.1} parent=1 // loop_header_branch
      %14 = sbr.rel (%p12) target = $region8
    $region5: #{tpu_custom_call.1} parent=1 // loop_body
      %s16 = ssub.s32 %s11, 1
      %s17 = ssub.s32 %s11, 2
      %s18 = sadd.s32 %s11, 1
      %s19 = ssub.s32 %s11, %s18
      %p20 = scmp.eq.s32.totalorder %s19, 0
      %s22 = sadd.s32 %s21, 1
      %s23 = scalar_select %p20, %s21, %s22
      %p26 = pneg %p20
      %p27 = scmp.eq.s32.totalorder %s11, 3
      %p28 = por %p26, %p27
      %p29 = scmp.ne.s32.totalorder %s21, %s24
      %p30 = scmp.eq.s32.totalorder %s11, 0
      %p31 = por %p29, %p30
      %p32 = scmp.ne.s32.totalorder %s21, %s24
      %p33 = scmp.eq.s32.totalorder %s16, 3
      %p34 = por %p32, %p33
      %p35 = scmp.ne.s32.totalorder %s24, %s25
      %p36 = scmp.eq.s32.totalorder %s16, 0
      %p37 = por %p35, %p36
      %p38 = scmp.ne.s32.totalorder %s24, %s25
      %p39 = scmp.eq.s32.totalorder %s17, 3
      %p40 = por %p38, %p39
      %p42 = scmp.ne.s32.totalorder %s25, %s41
      %p43 = scmp.eq.s32.totalorder %s17, 0
      %p44 = por %p42, %p43
      %s46 = sadd.s32 %s45, 1
      %p49 = scmp.eq.s32.totalorder %s11, 3
      %p50 = scmp.ne.s32.totalorder %s45, %s47
      %p51 = scmp.eq.s32.totalorder %s11, 0
      %p52 = por %p50, %p51
      %p53 = scmp.ne.s32.totalorder %s45, %s47
      %p54 = scmp.eq.s32.totalorder %s16, 3
      %p55 = por %p53, %p54
      %p56 = scmp.ne.s32.totalorder %s47, %s48
      %p57 = scmp.eq.s32.totalorder %s16, 0
      %p58 = por %p56, %p57
      %p59 = scmp.ne.s32.totalorder %s47, %s48
      %p60 = scmp.eq.s32.totalorder %s17, 3
      %p61 = por %p59, %p60
      %p63 = scmp.ne.s32.totalorder %s48, %s62
      %p64 = scmp.eq.s32.totalorder %s17, 0
      %p65 = por %p63, %p64
      %s67 = sadd.s32 %s66, 1
      %p70 = scmp.eq.s32.totalorder %s11, 3
      %p71 = scmp.ne.s32.totalorder %s66, %s68
      %p72 = scmp.eq.s32.totalorder %s11, 0
      %p73 = por %p71, %p72
      %p74 = scmp.ne.s32.totalorder %s66, %s68
      %p75 = scmp.eq.s32.totalorder %s16, 3
      %p76 = por %p74, %p75
      %p77 = scmp.ne.s32.totalorder %s68, %s69
      %p78 = scmp.eq.s32.totalorder %s16, 0
      %p79 = por %p77, %p78
      %p80 = scmp.ne.s32.totalorder %s68, %s69
      %p81 = scmp.eq.s32.totalorder %s17, 3
      %p82 = por %p80, %p81
      %p84 = scmp.ne.s32.totalorder %s69, %s83
      %p85 = scmp.eq.s32.totalorder %s17, 0
      %p86 = por %p84, %p85
      %p87 = scmp.le.s32.totalorder 1, %s11
      %p88 = scmp.lt.s32.totalorder %s11, 5
      %p89 = pnand %p87, %p88
      %p90 = pneg %p89
      // Predicated region
      $region9: #{tpu_custom_call.1} parent=5 // pred_check
        _
      $region10: #{tpu_custom_call.1} parent=5 // pred_check_branch
        %92 = sbr.rel (%p89) target = $region12
      $region11: #{tpu_custom_call.1} parent=5 // pred_region
        %s93 = ssub.s32 %s11, 1
      $region12: #{tpu_custom_call.1} parent=5 // pred_fallthru
        _
      %p94 = scmp.lt.s32.totalorder %s11, 4
      // Predicated region
      $region13: #{tpu_custom_call.1} parent=5 // pred_check
        %p95 = pneg %p94
      $region14: #{tpu_custom_call.1} parent=5 // pred_check_branch
        %97 = sbr.rel (%p95) target = $region16
      $region15: #{tpu_custom_call.1} parent=5 // pred_region
        // Predicated region
        $region17: #{tpu_custom_call.1} parent=15 // pred_check
          %p98 = pneg %p31
        $region18: #{tpu_custom_call.1} parent=15 // pred_check_branch
          %100 = sbr.rel (%p98) target = $region20
        $region19: #{tpu_custom_call.1} parent=15 // pred_region
          %s101 = smul.u32 8, %s11
          %p102 = scmp.lt.s32.totalorder %s101, 31
          %s103 = scalar_select %p102, %s101, 31
          %s104 = smul.addr %s103, 8
          %s105 = scalar_lea.vmem %s0, %s104
          %s106 = smul.u32 8, %s11
        $region20: #{tpu_custom_call.1} parent=15 // pred_fallthru
          _
      $region16: #{tpu_custom_call.1} parent=5 // pred_fallthru
        _
      %p107 = scmp.le.s32.totalorder 1, %s11
      %p108 = scmp.lt.s32.totalorder %s11, 5
      %p109 = pnand %p107, %p108
      %p110 = pneg %p109
      // Predicated region
      $region21: #{tpu_custom_call.1} parent=5 // pred_check
        _
      $region22: #{tpu_custom_call.1} parent=5 // pred_check_branch
        %112 = sbr.rel (%p109) target = $region24
      $region23: #{tpu_custom_call.1} parent=5 // pred_region
        %s113 = ssub.s32 %s11, 1
        %s114 = smul.u32 8, %s16
        %p115 = scmp.lt.s32.totalorder %s114, 31
        %s116 = scalar_select %p115, %s114, 31
        %s117 = smul.addr %s116, 8
        %s118 = scalar_lea.vmem %s0, %s117
        %p119 = pneg %p37
        %p120 = pneg %p34
        %p121 = pneg %p58
        %p122 = pneg %p55
        %p123 = pneg %p79
        %p124 = pneg %p76
        %s125 = smul.u32 8, %s16
        %p126 = scmp.lt.s32.totalorder %s125, 31
        %s127 = scalar_select %p126, %s125, 31
        %s128 = smul.addr %s127, 8
        %s129 = scalar_lea.vmem %s0, %s128
        %s130 = smul.u32 8, %s16
        %p131 = scmp.eq.s32.totalorder %s16, 0
        // Predicated region
        $region25: #{tpu_custom_call.1} parent=23 // pred_check
          %p132 = pneg %p131
        $region26: #{tpu_custom_call.1} parent=23 // pred_check_branch
          %134 = sbr.rel (%p132) target = $region28
        $region27: #{tpu_custom_call.1} parent=23 // pred_region
          %vm135 = vcmask 253952
          %136 = vst.msk [vmem:[#allocation2] sm:$0x1] %vm135, 0.0
          %137 = vst.msk [vmem:[#allocation4] sm:$0x1] %vm135, 0.0
        $region28: #{tpu_custom_call.1} parent=23 // pred_fallthru
          _
        %v138 = vld [vmem:[%s129] sm:$0xff]
        %v139 = vld [vmem:[%s129 + $0x8] sm:$0xff]
        %v140 = vld [vmem:[%s129 + $0x10] sm:$0xff]
        %v141 = vld [vmem:[%s129 + $0x18] sm:$0xff]
        %v142 = vld [vmem:[%s129 + $0x20] sm:$0xff]
        %v143 = vld [vmem:[%s129 + $0x28] sm:$0xff]
        %v144 = vld [vmem:[%s129 + $0x30] sm:$0xff]
        %v145 = vld [vmem:[%s129 + $0x38] sm:$0xff]
        %v146 = vld [vmem:[#allocation2] sm:$0x1]
        %vm147 = vcmask 261120
        %v148 = vsel %vm147, %v138, 0.0
        %v149 = vsel %vm147, %v139, 0.0
        %v150 = vadd.f32 %v148, %v149
        %v151 = vsel %vm147, %v140, 0.0
        %v152 = vadd.f32 %v150, %v151
        %v153 = vsel %vm147, %v141, 0.0
        %v154 = vadd.f32 %v152, %v153
        %v155 = vsel %vm147, %v142, 0.0
        %v156 = vadd.f32 %v154, %v155
        %v157 = vsel %vm147, %v143, 0.0
        %v158 = vadd.f32 %v156, %v157
        %v159 = vsel %vm147, %v144, 0.0
        %v160 = vadd.f32 %v158, %v159
        %v161 = vsel %vm147, %v145, 0.0
        %v162 = vadd.f32 %v160, %v161
        %v163 = vrot.slane %v162, 4
        %v164 = vadd.f32 %v162, %v163
        %v165 = vrot.slane %v164, 2
        %v166 = vadd.f32 %v164, %v165
        %v167 = vrot.slane %v166, 1
        %v168 = vadd.f32 %v166, %v167
        %v169 = vadd.f32 %v146, %v168
        %vm170 = vcmask 253952
        %171 = vst.msk [vmem:[#allocation2] sm:$0x1] %vm170, %v169
        %v172 = vld [vmem:[#allocation4] sm:$0x1]
        %v173 = vmul.f32 %v138, %v138
        %v174 = vmul.f32 %v139, %v139
        %v175 = vmul.f32 %v140, %v140
        %v176 = vmul.f32 %v141, %v141
        %v177 = vmul.f32 %v142, %v142
        %v178 = vmul.f32 %v143, %v143
        %v179 = vmul.f32 %v144, %v144
        %v180 = vmul.f32 %v145, %v145
        %v181 = vsel %vm147, %v173, 0.0
        %v182 = vsel %vm147, %v174, 0.0
        %v183 = vadd.f32 %v181, %v182
        %v184 = vsel %vm147, %v175, 0.0
        %v185 = vadd.f32 %v183, %v184
        %v186 = vsel %vm147, %v176, 0.0
        %v187 = vadd.f32 %v185, %v186
        %v188 = vsel %vm147, %v177, 0.0
        %v189 = vadd.f32 %v187, %v188
        %v190 = vsel %vm147, %v178, 0.0
        %v191 = vadd.f32 %v189, %v190
        %v192 = vsel %vm147, %v179, 0.0
        %v193 = vadd.f32 %v191, %v192
        %v194 = vsel %vm147, %v180, 0.0
        %v195 = vadd.f32 %v193, %v194
        %v196 = vrot.slane %v195, 4
        %v197 = vadd.f32 %v195, %v196
        %v198 = vrot.slane %v197, 2
        %v199 = vadd.f32 %v197, %v198
        %v200 = vrot.slane %v199, 1
        %v201 = vadd.f32 %v199, %v200
        %v202 = vadd.f32 %v172, %v201
        %203 = vst.msk [vmem:[#allocation4] sm:$0x1] %vm170, %v202
        %p204 = scmp.eq.s32.totalorder %s16, 3
        // Predicated region
        $region29: #{tpu_custom_call.1} parent=23 // pred_check
          %p205 = pneg %p204
        $region30: #{tpu_custom_call.1} parent=23 // pred_check_branch
          %207 = sbr.rel (%p205) target = $region32
        $region31: #{tpu_custom_call.1} parent=23 // pred_region
          %v208 = vld [vmem:[#allocation2] sm:$0x1]
          %v209 = vmul.f32 %v208, 0.005
          %v210 = vld [vmem:[#allocation4] sm:$0x1]
          %v211 = vmul.f32 %v210, 0.005
          %v212 = vmul.f32 %v209, %v209
          %v213 = vsub.f32 %v211, %v212
          %214 = vst.msk [vmem:[#allocation2] sm:$0x1] %vm170, %v209
          %v215 = vadd.f32 %v213, 1e-05
          %v216 = vrsqrt.pop %v215
          %217 = vst.msk [vmem:[#allocation4] sm:$0x1] %vm170, %v216
        $region32: #{tpu_custom_call.1} parent=23 // pred_fallthru
          _
        // Predicated region
        $region33: #{tpu_custom_call.1} parent=23 // pred_check
          %p218 = pneg %p55
        $region34: #{tpu_custom_call.1} parent=23 // pred_check_branch
          %220 = sbr.rel (%p218) target = $region36
        $region35: #{tpu_custom_call.1} parent=23 // pred_region
          %s222 = ssub.s32 16, 16
          %223 = vsyncadd [#allocation3], %s222
          %s225 = sshll.u32 [#allocation2], 4
          %s226 = int_to_ptr.vmem [resolvable:$true] %s225
          %228 = dma.vmem_to_hbm [thread:$0]  %s226, 16, %s1, [#allocation3]
        $region36: #{tpu_custom_call.1} parent=23 // pred_fallthru
          _
        // Predicated region
        $region37: #{tpu_custom_call.1} parent=23 // pred_check
          %p229 = pneg %p76
        $region38: #{tpu_custom_call.1} parent=23 // pred_check_branch
          %231 = sbr.rel (%p229) target = $region40
        $region39: #{tpu_custom_call.1} parent=23 // pred_region
          %s233 = ssub.s32 16, 16
          %234 = vsyncadd [#allocation5], %s233
          %s236 = sshll.u32 [#allocation4], 4
          %s237 = int_to_ptr.vmem [resolvable:$true] %s236
          %239 = dma.vmem_to_hbm [thread:$0]  %s237, 16, %s2, [#allocation5]
        $region40: #{tpu_custom_call.1} parent=23 // pred_fallthru
          _
        // Predicated region
        $region41: #{tpu_custom_call.1} parent=23 // pred_check
          %p240 = pneg %p55
        $region42: #{tpu_custom_call.1} parent=23 // pred_check_branch
          %242 = sbr.rel (%p240) target = $region44
        $region43: #{tpu_custom_call.1} parent=23 // pred_region
          %243 = dma.done [#allocation3], 16
        $region44: #{tpu_custom_call.1} parent=23 // pred_fallthru
          _
        // Predicated region
        $region45: #{tpu_custom_call.1} parent=23 // pred_check
          %p244 = pneg %p76
        $region46: #{tpu_custom_call.1} parent=23 // pred_check_branch
          %246 = sbr.rel (%p244) target = $region48
        $region47: #{tpu_custom_call.1} parent=23 // pred_region
          %247 = dma.done [#allocation5], 16
        $region48: #{tpu_custom_call.1} parent=23 // pred_fallthru
          _
      $region24: #{tpu_custom_call.1} parent=5 // pred_fallthru
        _
      %p248 = scmp.le.s32.totalorder 2, %s11
      // Predicated region
      $region49: #{tpu_custom_call.1} parent=5 // pred_check
        %p249 = pneg %p248
      $region50: #{tpu_custom_call.1} parent=5 // pred_check_branch
        %251 = sbr.rel (%p249) target = $region52
      $region51: #{tpu_custom_call.1} parent=5 // pred_region
        %s252 = ssub.s32 %s11, 2
      $region52: #{tpu_custom_call.1} parent=5 // pred_fallthru
        _
    $region6: #{tpu_custom_call.1} parent=1 // loop_footer
      %s15 = sadd.s32 1, %s11
    $region7: #{tpu_custom_call.1} parent=1 // loop_footer_branch
      %10 = sbr.rel target = $region3
    $region8: #{tpu_custom_call.1} parent=1 // loop_exit
      _
    %253 = vsyncpa [#allocation3], 1
    %s254 = scalar_lea.sflag [#allocation3], 1
    %255 = vsyncpa %s254, 1
    %256 = vsyncpa [#allocation5], 1

</llo_original>
